<compile_context>
chip_gen: v5e
topology: v5e:2x2
jax: 0.10.0
libtpu: 0.0.40
codegen_flags: <defaults>
</compile_context>

<pallas_src>
import functools

import jax
import jax.numpy as jnp
from jax.experimental import pallas as pl
from jax.experimental.pallas import tpu as pltpu

LEAKY_SLOPE = 0.01  # PyTorch nn.LeakyReLU() default negative_slope


def _leaky_relu(x):
    # max(x, slope*x): 1 mul + 1 max instead of cmp + mul + select.
    return jnp.maximum(x, LEAKY_SLOPE * x)


def _round_up(n, m):
    return ((n + m - 1) // m) * m


def mlp_sdf_kernel(x_ref, w1_ref, bias_ref, w2_ref, w3_ref, o_ref,
                   *, hidden, d_out, bf16_epilogue):
    # Transposed layout: batch on the lane axis.
    #   x_ref    : [d_in,  TB] bf16        w1_ref : [H, d_in]  bf16
    #   w2_ref   : [H, H]      bf16        w3_ref : [d_out, H] bf16
    #   bias_ref : [max(H,d_out), 3] f32   o_ref  : [d_out, TB] f32
    b1 = bias_ref[0:hidden, 0:1]
    b2 = bias_ref[0:hidden, 1:2]
    b3 = bias_ref[0:d_out, 2:3]

    # Layer 1 (single dot over the pre-concatenated input).
    h = jnp.dot(w1_ref[...], x_ref[...], preferred_element_type=jnp.float32)
    if bf16_epilogue:
        h = _leaky_relu(h.astype(jnp.bfloat16) + b1.astype(jnp.bfloat16))
    else:
        h = _leaky_relu(h + b1).astype(jnp.bfloat16)

    # Layer 2.
    h = jnp.dot(w2_ref[...], h, preferred_element_type=jnp.float32)
    if bf16_epilogue:
        h = _leaky_relu(h.astype(jnp.bfloat16) + b2.astype(jnp.bfloat16))
    else:
        h = _leaky_relu(h + b2).astype(jnp.bfloat16)

    # Layer 3 (final bias-add stays in f32 for output precision).
    o = jnp.dot(w3_ref[...], h, preferred_element_type=jnp.float32) + b3
    o_ref[...] = o.astype(o_ref.dtype)


def mlp_sdf_predictor(latent_space, xyz, params, *, tile_b=8192, bf16_epilogue=None):
    """Forward pass equivalent to MLP_SDF_Predictor.forward (PyTorch)."""
    w1, b1, w2, b2, w3, b3 = params            # PyTorch layout: W (out,in), b (out,1)
    B, latent_dim = latent_space.shape
    xyz_dim = xyz.shape[1]
    d_in = latent_dim + xyz_dim
    hidden = w1.shape[0]
    d_out = w3.shape[0]

    if bf16_epilogue is None:
        # bf16 VPU exists on v6e / v7x; keep the f32 epilogue on v5e and older.
        kind = jax.devices()[0].device_kind.lower()
        bf16_epilogue = not any(v in kind for v in ("v2", "v3", "v4", "v5"))

    # Batch on the 128-lane axis; large tiles amortize per-grid-step overhead.
    # Cap so f32 intermediates fit v7x's 64 MiB VMEM; clamp down for tiny B.
    tile_b = min(int(tile_b), 32768)
    tile_b = max(128, (tile_b // 128) * 128)
    tile_b = min(tile_b, _round_up(B, 128))
    B_pad = _round_up(B, tile_b)
    grid = (B_pad // tile_b,)

    # Single fused input operand: concat + pad + transpose + bf16 cast
    # (fuses into one pass under jit).
    x = jnp.concatenate((latent_space, xyz), axis=1)              # [B, d_in]
    x_t = jnp.pad(x, ((0, B_pad - B), (0, 0))).T.astype(jnp.bfloat16)  # [d_in, B_pad]

    w1b = w1.astype(jnp.bfloat16)
    w2b = w2.astype(jnp.bfloat16)
    w3b = w3.astype(jnp.bfloat16)

    # Pack the three biases into one small f32 operand: col0=b1, col1=b2, col2=b3.
    bh = max(hidden, d_out)
    bias_pack = jnp.zeros((bh, 3), jnp.float32)
    bias_pack = bias_pack.at[:hidden, 0].set(b1[:, 0])
    bias_pack = bias_pack.at[:hidden, 1].set(b2[:, 0])
    bias_pack = bias_pack.at[:d_out, 2].set(b3[:, 0])

    # Rough per-tile VMEM estimate: bf16 inputs (double-buffered), f32 output
    # blocks, f32/bf16 hidden intermediates.  Used to raise v5e's 16 MiB default
    # scoped limit when the tile is big; capped at 64 MiB (v7x physical).
    per_lane = 2 * d_in * 2 + 2 * d_out * 4 + hidden * (3 * 4 + 2 * 2)
    vmem_est = tile_b * per_lane + (1 << 20)
    vmem_limit = int(min(max(2 * vmem_est, 32 << 20), 64 << 20))

    full = lambda i: (0, 0)   # resident weights/biases: same whole block each step

    kernel = functools.partial(mlp_sdf_kernel, hidden=hidden, d_out=d_out,
                               bf16_epilogue=bool(bf16_epilogue))

    out_t = pl.pallas_call(
        kernel,
        out_shape=jax.ShapeDtypeStruct((d_out, B_pad), jnp.float32),
        grid_spec=pltpu.PrefetchScalarGridSpec(
            num_scalar_prefetch=0,
            grid=grid,
            in_specs=[
                pl.BlockSpec((d_in, tile_b), lambda i: (0, i)),   # fused input tile
                pl.BlockSpec((hidden, d_in), full),               # W1
                pl.BlockSpec((bh, 3), full),                      # packed biases
                pl.BlockSpec((hidden, hidden), full),             # W2
                pl.BlockSpec((d_out, hidden), full),              # W3
            ],
            out_specs=pl.BlockSpec((d_out, tile_b), lambda i: (0, i)),  # lane-dense
        ),
        compiler_params=pltpu.CompilerParams(
            # Batch tiles are independent -> shard across v7x's 2 TensorCores.
            # TODO(synk): confirm in an xprof trace that "parallel" shards the
            # grid on v7x; otherwise switch to pltpu.CORE_PARALLEL.
            dimension_semantics=("parallel",),
            vmem_limit_bytes=vmem_limit,
        ),
    )(x_t, w1b, bias_pack, w2b, w3b)

    # Layout plumbing back to the PyTorch-facing [B, d_out] shape (plain JAX,
    # fuses with the consumer under jit).
    return out_t.T[:B, :]


def init_params(key, latent_dim, xyz_dim, hidden_dim, output_dim):
    """Deterministic synthetic init (PyTorch-Linear-like uniform fan-in scaling)."""
    d_in = latent_dim + xyz_dim
    ks = jax.random.split(key, 6)

    def lin(kw, kb, fan_in, fan_out):
        bound = 1.0 / jnp.sqrt(fan_in)
        w = jax.random.uniform(kw, (fan_out, fan_in), jnp.float32, -bound, bound)
        b = jax.random.uniform(kb, (fan_out, 1), jnp.float32, -bound, bound)
        return w, b

    w1, b1 = lin(ks[0], ks[1], d_in, hidden_dim)
    w2, b2 = lin(ks[2], ks[3], hidden_dim, hidden_dim)
    w3, b3 = lin(ks[4], ks[5], hidden_dim, output_dim)
    return (w1, b1, w2, b2, w3, b3)


def reference_forward(latent_space, xyz, params):
    """Pure-JAX f32 reference matching the PyTorch forward semantics."""
    w1, b1, w2, b2, w3, b3 = params
    x = jnp.concatenate((latent_space, xyz), axis=1)
    h = _leaky_relu(x @ w1.T + b1.T)
    h = _leaky_relu(h @ w2.T + b2.T)
    return h @ w3.T + b3.T


if __name__ == "__main__":
    # Small, module-consistent shapes: SDF predictor takes a latent code + xyz.
    # B=300 is deliberately NOT a multiple of 128 to exercise the padding path.
    B, LATENT, XYZ, HIDDEN, OUT = 300, 13, 3, 32, 1

    key = jax.random.PRNGKey(0)
    k_lat, k_xyz, k_par = jax.random.split(key, 3)

    latent_space = jax.random.normal(k_lat, (B, LATENT), jnp.float32)
    xyz = jax.random.normal(k_xyz, (B, XYZ), jnp.float32)
    params = init_params(k_par, LATENT, XYZ, HIDDEN, OUT)

    fwd = jax.jit(mlp_sdf_predictor)   # fuses the wrapper layout passes
    out = fwd(latent_space, xyz, params)
    out = jax.block_until_ready(out)

    ref = reference_forward(latent_space, xyz, params)
    assert out.shape == (B, OUT)
    # bf16 MXU inputs (+ bf16 epilogue on v6e/v7x) with f32 accumulation:
    # loosened tolerance vs the f32 reference.
    assert jnp.allclose(out, ref, atol=3e-2, rtol=3e-2), "mismatch vs reference"

    print("KERNEL_OK")
</pallas_src>

<mosaic_0001>
module attributes {stable_mosaic.version = 11 : i64} {
  func.func @mlp_sdf_kernel(%arg0: i32, %arg1: memref<16x384xbf16, #tpu.memory_space<vmem>>, %arg2: memref<32x16xbf16, #tpu.memory_space<vmem>>, %arg3: memref<32x3xf32, #tpu.memory_space<vmem>>, %arg4: memref<32x32xbf16, #tpu.memory_space<vmem>>, %arg5: memref<1x32xbf16, #tpu.memory_space<vmem>>, %arg6: memref<1x384xf32, #tpu.memory_space<vmem>>) attributes {dimension_semantics = [#tpu.dimension_semantics<parallel>], iteration_bounds = array<i64: 1>, scalar_prefetch = 0 : i64, scratch_operands = 0 : i64, tpu.core_type = #tpu.core_type<tc>, window_params = [{transform_indices = @transform_0, window_bounds = array<i64: 16, 384>}, {pipeline_mode = #tpu.pipeline_mode<synchronous>, transform_indices = @transform_1, window_bounds = array<i64: 32, 16>}, {pipeline_mode = #tpu.pipeline_mode<synchronous>, transform_indices = @transform_2, window_bounds = array<i64: 32, 3>}, {pipeline_mode = #tpu.pipeline_mode<synchronous>, transform_indices = @transform_3, window_bounds = array<i64: 32, 32>}, {pipeline_mode = #tpu.pipeline_mode<synchronous>, transform_indices = @transform_4, window_bounds = array<i64: 1, 32>}, {transform_indices = @transform_5, window_bounds = array<i64: 1, 384>}]} {
    %c0 = arith.constant 0 : index
    %c0_0 = arith.constant 0 : index
    %0 = vector.load %arg3[%c0, %c0_0] : memref<32x3xf32, #tpu.memory_space<vmem>>, vector<32x1xf32>
    %c0_1 = arith.constant 0 : index
    %c1 = arith.constant 1 : index
    %1 = vector.load %arg3[%c0_1, %c1] : memref<32x3xf32, #tpu.memory_space<vmem>>, vector<32x1xf32>
    %c0_2 = arith.constant 0 : index
    %c2 = arith.constant 2 : index
    %2 = vector.load %arg3[%c0_2, %c2] : memref<32x3xf32, #tpu.memory_space<vmem>>, vector<1x1xf32>
    %c0_3 = arith.constant 0 : index
    %c0_4 = arith.constant 0 : index
    %3 = vector.load %arg2[%c0_3, %c0_4] : memref<32x16xbf16, #tpu.memory_space<vmem>>, vector<32x16xbf16>
    %c0_5 = arith.constant 0 : index
    %c0_6 = arith.constant 0 : index
    %4 = vector.load %arg1[%c0_5, %c0_6] : memref<16x384xbf16, #tpu.memory_space<vmem>>, vector<16x384xbf16>
    %cst = arith.constant dense<0.000000e+00> : vector<32x384xf32>
    %5 = tpu.matmul %3, %4, %cst {dimension_numbers = #tpu.dot_dimension_numbers<[1], [0], [0], [1], [0, 0, 1, 1], [], []>} : vector<32x16xbf16>, vector<16x384xbf16>, vector<32x384xf32> -> vector<32x384xf32>
    %6 = arith.truncf %5 : vector<32x384xf32> to vector<32x384xbf16>
    %7 = arith.truncf %0 : vector<32x1xf32> to vector<32x1xbf16>
    %8 = vector.broadcast %7 : vector<32x1xbf16> to vector<32x384xbf16>
    %9 = arith.addf %6, %8 : vector<32x384xbf16>
    %cst_7 = arith.constant 1.000980e-02 : bf16
    %10 = vector.broadcast %cst_7 : bf16 to vector<32x384xbf16>
    %11 = arith.mulf %10, %9 : vector<32x384xbf16>
    %12 = arith.maximumf %9, %11 : vector<32x384xbf16>
    %c0_8 = arith.constant 0 : index
    %c0_9 = arith.constant 0 : index
    %13 = vector.load %arg4[%c0_8, %c0_9] : memref<32x32xbf16, #tpu.memory_space<vmem>>, vector<32x32xbf16>
    %cst_10 = arith.constant dense<0.000000e+00> : vector<32x384xf32>
    %14 = tpu.matmul %13, %12, %cst_10 {dimension_numbers = #tpu.dot_dimension_numbers<[1], [0], [0], [1], [0, 0, 1, 1], [], []>} : vector<32x32xbf16>, vector<32x384xbf16>, vector<32x384xf32> -> vector<32x384xf32>
    %15 = arith.truncf %14 : vector<32x384xf32> to vector<32x384xbf16>
    %16 = arith.truncf %1 : vector<32x1xf32> to vector<32x1xbf16>
    %17 = vector.broadcast %16 : vector<32x1xbf16> to vector<32x384xbf16>
    %18 = arith.addf %15, %17 : vector<32x384xbf16>
    %cst_11 = arith.constant 1.000980e-02 : bf16
    %19 = vector.broadcast %cst_11 : bf16 to vector<32x384xbf16>
    %20 = arith.mulf %19, %18 : vector<32x384xbf16>
    %21 = arith.maximumf %18, %20 : vector<32x384xbf16>
    %c0_12 = arith.constant 0 : index
    %c0_13 = arith.constant 0 : index
    %22 = vector.load %arg5[%c0_12, %c0_13] : memref<1x32xbf16, #tpu.memory_space<vmem>>, vector<1x32xbf16>
    %cst_14 = arith.constant dense<0.000000e+00> : vector<1x384xf32>
    %23 = tpu.matmul %22, %21, %cst_14 {dimension_numbers = #tpu.dot_dimension_numbers<[1], [0], [0], [1], [0, 0, 1, 1], [], []>} : vector<1x32xbf16>, vector<32x384xbf16>, vector<1x384xf32> -> vector<1x384xf32>
    %24 = vector.broadcast %2 : vector<1x1xf32> to vector<1x384xf32>
    %25 = arith.addf %23, %24 : vector<1x384xf32>
    %c0_15 = arith.constant 0 : index
    %c0_16 = arith.constant 0 : index
    %26 = vector.load %arg6[%c0_15, %c0_16] : memref<1x384xf32, #tpu.memory_space<vmem>>, vector<1x384xf32>
    tpu.vector_store %arg6[%c0_15, %c0_16], %25 {strides = array<i32>} : memref<1x384xf32, #tpu.memory_space<vmem>>, vector<1x384xf32>,
    return
  }
  func.func @transform_0(%arg0: i32) -> (i32, i32) {
    %c0_i32 = arith.constant 0 : i32
    %c0_i32_0 = arith.constant 0 : i32
    return %c0_i32, %arg0 : i32, i32
  }
  func.func @transform_1(%arg0: i32) -> (i32, i32) {
    %c0_i32 = arith.constant 0 : i32
    %c0_i32_0 = arith.constant 0 : i32
    %c0_i32_1 = arith.constant 0 : i32
    return %c0_i32, %c0_i32_0 : i32, i32
  }
  func.func @transform_2(%arg0: i32) -> (i32, i32) {
    %c0_i32 = arith.constant 0 : i32
    %c0_i32_0 = arith.constant 0 : i32
    %c0_i32_1 = arith.constant 0 : i32
    return %c0_i32, %c0_i32_0 : i32, i32
  }
  func.func @transform_3(%arg0: i32) -> (i32, i32) {
    %c0_i32 = arith.constant 0 : i32
    %c0_i32_0 = arith.constant 0 : i32
    %c0_i32_1 = arith.constant 0 : i32
    return %c0_i32, %c0_i32_0 : i32, i32
  }
  func.func @transform_4(%arg0: i32) -> (i32, i32) {
    %c0_i32 = arith.constant 0 : i32
    %c0_i32_0 = arith.constant 0 : i32
    %c0_i32_1 = arith.constant 0 : i32
    return %c0_i32, %c0_i32_0 : i32, i32
  }
  func.func @transform_5(%arg0: i32) -> (i32, i32) {
    %c0_i32 = arith.constant 0 : i32
    %c0_i32_0 = arith.constant 0 : i32
    return %c0_i32, %arg0 : i32, i32
  }
}

</mosaic_0001>

<llo_original>
// kernel: mlp_sdf_predictor.1
$region0: #{mlp_sdf_predictor.1}
  #allocation0 [shape = 'u32[]', space=smem, size = 0x4, offset = 0x4, fixed_abs, tag = 'smem constant byte address 0x4 - core index']
  #allocation1 [shape = 'u32[72,128]{1,0:T(1,128)}', space=vmem, size = 0x9000, scoped, tag = 'internal scratch']
  %s0 = inlined_call_operand.vmem [shape: bf16[16,384], index: 0, kind: input, shape index: {}]
  %s1 = inlined_call_operand.vmem [shape: bf16[32,16], index: 1, kind: input, shape index: {}]
  %s2 = inlined_call_operand.vmem [shape: f32[32,3], index: 2, kind: input, shape index: {}]
  %s3 = inlined_call_operand.vmem [shape: bf16[32,32], index: 3, kind: input, shape index: {}]
  %s4 = inlined_call_operand.vmem [shape: bf16[1,32], index: 4, kind: input, shape index: {}]
  %s5 = inlined_call_operand.vmem [shape: f32[1,384], index: 5, kind: output, shape index: {}]
  %s6 = sld [smem:[#allocation0]]
  $region30: #{mlp_sdf_predictor.1} parent=0
    _
  %s8 = ssub.s32 1, %s6
  %s9 = scalar_select 0, %s8, %s6
  // Predicated region
  $region2: #{mlp_sdf_predictor.1} parent=0 // pred_check
    _
  $region3: #{mlp_sdf_predictor.1} parent=0 // pred_check_branch
    %11 = sbr.rel (0) target = $region5
  $region4: #{mlp_sdf_predictor.1} parent=0 // pred_region
    _
  $region5: #{mlp_sdf_predictor.1} parent=0 // pred_fallthru
    _
  // Predicated region
  $region6: #{mlp_sdf_predictor.1} parent=0 // pred_check
    _
  $region7: #{mlp_sdf_predictor.1} parent=0 // pred_check_branch
    %13 = sbr.rel (0) target = $region9
  $region8: #{mlp_sdf_predictor.1} parent=0 // pred_region
    _
  $region9: #{mlp_sdf_predictor.1} parent=0 // pred_fallthru
    _
  // Predicated region
  $region10: #{mlp_sdf_predictor.1} parent=0 // pred_check
    _
  $region11: #{mlp_sdf_predictor.1} parent=0 // pred_check_branch
    %15 = sbr.rel (0) target = $region13
  $region12: #{mlp_sdf_predictor.1} parent=0 // pred_region
    _
  $region13: #{mlp_sdf_predictor.1} parent=0 // pred_fallthru
    _
  // Predicated region
  $region14: #{mlp_sdf_predictor.1} parent=0 // pred_check
    _
  $region15: #{mlp_sdf_predictor.1} parent=0 // pred_check_branch
    %17 = sbr.rel (0) target = $region17
  $region16: #{mlp_sdf_predictor.1} parent=0 // pred_region
    _
  $region17: #{mlp_sdf_predictor.1} parent=0 // pred_fallthru
    _
  // Predicated region
  $region18: #{mlp_sdf_predictor.1} parent=0 // pred_check
    _
  $region19: #{mlp_sdf_predictor.1} parent=0 // pred_check_branch
    %19 = sbr.rel (0) target = $region21
  $region20: #{mlp_sdf_predictor.1} parent=0 // pred_region
    _
  $region21: #{mlp_sdf_predictor.1} parent=0 // pred_fallthru
    _
  %v21 = vld [vmem:[%s2] sm:$0xff]
  %v22 = vld [vmem:[%s2 + $0x8] sm:$0xff]
  %v23 = vld [vmem:[%s2 + $0x10] sm:$0xff]
  %v24 = vld [vmem:[%s2 + $0x18] sm:$0xff]
  %v25 = vld [vmem:[%s2] sm:$0x1]
  %v26 = vld [vmem:[%s1] sm:$0xf]
  %v27 = vld [vmem:[%s1 + $0x4] sm:$0xf]
  %v28 = vld [vmem:[%s1 + $0x8] sm:$0xf]
  %v29 = vld [vmem:[%s1 + $0xc] sm:$0xf]
  %v30 = vld [vmem:[%s0] sm:$0xff]
  %v31 = vld [vmem:[%s0 + $0x8] sm:$0xf]
  %v32 = vld [vmem:[%s0 + $0xc] sm:$0xff]
  %v33 = vld [vmem:[%s0 + $0x14] sm:$0xf]
  %v38 = vunpack.c.l.b16 %v26
  %v39 = vunpack.c.l.b16 %v27
  %v40 = vunpack.c.l.b16 %v28
  %v41 = vunpack.c.l.b16 %v29
  %v42 = vpack.c.b16 %v39, %v38
  %v43 = vpack.c.b16 %v41, %v40
  %v48 = vunpack.c.l.b16 %v30
  %v49 = vunpack.c.h.b16 %v30
  %v50 = vunpack.c.l.b16 %v31
  %v51 = vunpack.c.l.b16 %v32
  %v52 = vunpack.c.h.b16 %v32
  %v53 = vunpack.c.l.b16 %v33
  %v54 = vpack.c.b16 %v51, %v48
  %v55 = vpack.c.b16 %v52, %v49
  %v56 = vpack.c.b16 %v53, %v50
  %vm60 = vcmask 130048
  %v62 = vsel %vm60, %v42, 0
  %v65 = vsel %vm60, %v43, 0
  %67 = vmatpush.bf16.msra.mxu0 0
  %68 = vmatpush.bf16.msra.mxu0 0
  %69 = vmatpush.bf16.msra.mxu0 0
  %70 = vmatpush.bf16.msra.mxu0 0
  %71 = vmatpush.bf16.msra.mxu0 0
  %72 = vmatpush.bf16.msra.mxu0 0
  %73 = vmatpush.bf16.msra.mxu0 0
  %74 = vmatpush.bf16.msra.mxu0 %v54
  %75 = vmatmul.bf16.gmra.mxu0 %v62
  %v76 = vpop.f32.mrf.mxu0
  %v77 = vadd.f32 0.0, %v76
  %v78 = vpop.f32.mrf.mxu0
  %v79 = vadd.f32 0.0, %v78
  %80 = vmatmul.bf16.gmra.mxu0 %v65
  %v81 = vpop.f32.mrf.mxu0
  %v82 = vadd.f32 0.0, %v81
  %v83 = vpop.f32.mrf.mxu0
  %v84 = vadd.f32 0.0, %v83
  %85 = vdwg.mxu0
  %86 = vmatpush.bf16.msra.mxu0 0
  %87 = vmatpush.bf16.msra.mxu0 0
  %88 = vmatpush.bf16.msra.mxu0 0
  %89 = vmatpush.bf16.msra.mxu0 0
  %90 = vmatpush.bf16.msra.mxu0 0
  %91 = vmatpush.bf16.msra.mxu0 0
  %92 = vmatpush.bf16.msra.mxu0 0
  %93 = vmatpush.bf16.msra.mxu0 %v55
  %94 = vmatmul.bf16.gmra.mxu0 %v62
  %v95 = vpop.f32.mrf.mxu0
  %v96 = vadd.f32 0.0, %v95
  %v97 = vpop.f32.mrf.mxu0
  %v98 = vadd.f32 0.0, %v97
  %99 = vmatmul.bf16.gmra.mxu0 %v65
  %v100 = vpop.f32.mrf.mxu0
  %v101 = vadd.f32 0.0, %v100
  %v102 = vpop.f32.mrf.mxu0
  %v103 = vadd.f32 0.0, %v102
  %104 = vdwg.mxu0
  %105 = vmatpush.bf16.msra.mxu0 0
  %106 = vmatpush.bf16.msra.mxu0 0
  %107 = vmatpush.bf16.msra.mxu0 0
  %108 = vmatpush.bf16.msra.mxu0 0
  %109 = vmatpush.bf16.msra.mxu0 0
  %110 = vmatpush.bf16.msra.mxu0 0
  %111 = vmatpush.bf16.msra.mxu0 0
  %112 = vmatpush.bf16.msra.mxu0 %v56
  %113 = vmatmul.bf16.gmra.mxu0 %v62
  %v114 = vpop.f32.mrf.mxu0
  %v115 = vadd.f32 0.0, %v114
  %v116 = vpop.f32.mrf.mxu0
  %v117 = vadd.f32 0.0, %v116
  %118 = vmatmul.bf16.gmra.mxu0 %v65
  %v119 = vpop.f32.mrf.mxu0
  %v120 = vadd.f32 0.0, %v119
  %v121 = vpop.f32.mrf.mxu0
  %v122 = vadd.f32 0.0, %v121
  %123 = vdwg.mxu0
  %v124 = vpack.c.bf16 %v96, %v77
  %v125 = vpack.c.bf16 %v115, %v115
  %v126 = vpack.c.bf16 %v98, %v79
  %v127 = vpack.c.bf16 %v117, %v117
  %v128 = vpack.c.bf16 %v101, %v82
  %v129 = vpack.c.bf16 %v120, %v120
  %v130 = vpack.c.bf16 %v103, %v84
  %v131 = vpack.c.bf16 %v122, %v122
  %v132 = vpack.c.bf16 %v21, %v21
  %v133 = vpack.c.bf16 %v22, %v22
  %v134 = vpack.c.bf16 %v23, %v23
  %v135 = vpack.c.bf16 %v24, %v24
  %137 = vset.pattern.permute.xlu0 0
  %138 = vperm.xlu0 %137, %v132
  %v139 = vpop.permute.xlu0 %138
  %v142 = vunpack.c.l.s4 839922192
  %v143 = vunpack.c.0.s8 %v142
  %v144 = vperm.slane %v139, %v143
  %146 = vset.pattern.permute.xlu0 0
  %147 = vperm.xlu0 %146, %v133
  %v148 = vpop.permute.xlu0 %147
  %v151 = vunpack.c.l.s4 839922192
  %v152 = vunpack.c.0.s8 %v151
  %v153 = vperm.slane %v148, %v152
  %155 = vset.pattern.permute.xlu0 0
  %156 = vperm.xlu0 %155, %v134
  %v157 = vpop.permute.xlu0 %156
  %v160 = vunpack.c.l.s4 839922192
  %v161 = vunpack.c.0.s8 %v160
  %v162 = vperm.slane %v157, %v161
  %164 = vset.pattern.permute.xlu0 0
  %165 = vperm.xlu0 %164, %v135
  %v166 = vpop.permute.xlu0 %165
  %v169 = vunpack.c.l.s4 839922192
  %v170 = vunpack.c.0.s8 %v169
  %v171 = vperm.slane %v166, %v170
  %v172 = vunpack.c.l.bf16 %v124
  %v173 = vunpack.c.h.bf16 %v124
  %v174 = vunpack.c.l.bf16 %v125
  %v175 = vunpack.c.l.bf16 %v126
  %v176 = vunpack.c.h.bf16 %v126
  %v177 = vunpack.c.l.bf16 %v127
  %v178 = vunpack.c.l.bf16 %v128
  %v179 = vunpack.c.h.bf16 %v128
  %v180 = vunpack.c.l.bf16 %v129
  %v181 = vunpack.c.l.bf16 %v130
  %v182 = vunpack.c.h.bf16 %v130
  %v183 = vunpack.c.l.bf16 %v131
  %v184 = vunpack.c.l.bf16 %v144
  %v185 = vunpack.c.l.bf16 %v153
  %v186 = vunpack.c.l.bf16 %v162
  %v187 = vunpack.c.l.bf16 %v171
  %v188 = vadd.f32 %v172, %v184
  %v189 = vadd.f32 %v173, %v184
  %v190 = vadd.f32 %v174, %v184
  %v191 = vadd.f32 %v175, %v185
  %v192 = vadd.f32 %v176, %v185
  %v193 = vadd.f32 %v177, %v185
  %v194 = vadd.f32 %v178, %v186
  %v195 = vadd.f32 %v179, %v186
  %v196 = vadd.f32 %v180, %v186
  %v197 = vadd.f32 %v181, %v187
  %v198 = vadd.f32 %v182, %v187
  %v199 = vadd.f32 %v183, %v187
  %v200 = vpack.c.bf16 %v189, %v188
  %v201 = vpack.c.bf16 %v190, %v190
  %v202 = vpack.c.bf16 %v192, %v191
  %v203 = vpack.c.bf16 %v193, %v193
  %v204 = vpack.c.bf16 %v195, %v194
  %v205 = vpack.c.bf16 %v196, %v196
  %v206 = vpack.c.bf16 %v198, %v197
  %v207 = vpack.c.bf16 %v199, %v199
  %v208 = vunpack.c.l.bf16 %v200
  %v209 = vunpack.c.h.bf16 %v200
  %v210 = vunpack.c.l.bf16 %v201
  %v211 = vunpack.c.l.bf16 %v202
  %v212 = vunpack.c.h.bf16 %v202
  %v213 = vunpack.c.l.bf16 %v203
  %v214 = vunpack.c.l.bf16 %v204
  %v215 = vunpack.c.h.bf16 %v204
  %v216 = vunpack.c.l.bf16 %v205
  %v217 = vunpack.c.l.bf16 %v206
  %v218 = vunpack.c.h.bf16 %v206
  %v219 = vunpack.c.l.bf16 %v207
  %v220 = vmul.f32 %v208, 0.010009766
  %v221 = vmul.f32 %v209, 0.010009766
  %v222 = vmul.f32 %v210, 0.010009766
  %v223 = vmul.f32 %v211, 0.010009766
  %v224 = vmul.f32 %v212, 0.010009766
  %v225 = vmul.f32 %v213, 0.010009766
  %v226 = vmul.f32 %v214, 0.010009766
  %v227 = vmul.f32 %v215, 0.010009766
  %v228 = vmul.f32 %v216, 0.010009766
  %v229 = vmul.f32 %v217, 0.010009766
  %v230 = vmul.f32 %v218, 0.010009766
  %v231 = vmul.f32 %v219, 0.010009766
  %v232 = vpack.c.bf16 %v221, %v220
  %v233 = vpack.c.bf16 %v222, %v222
  %v234 = vpack.c.bf16 %v224, %v223
  %v235 = vpack.c.bf16 %v225, %v225
  %v236 = vpack.c.bf16 %v227, %v226
  %v237 = vpack.c.bf16 %v228, %v228
  %v238 = vpack.c.bf16 %v230, %v229
  %v239 = vpack.c.bf16 %v231, %v231
  %v240 = vunpack.c.l.bf16 %v232
  %v241 = vunpack.c.h.bf16 %v232
  %v242 = vunpack.c.l.bf16 %v233
  %v243 = vunpack.c.l.bf16 %v234
  %v244 = vunpack.c.h.bf16 %v234
  %v245 = vunpack.c.l.bf16 %v235
  %v246 = vunpack.c.l.bf16 %v236
  %v247 = vunpack.c.h.bf16 %v236
  %v248 = vunpack.c.l.bf16 %v237
  %v249 = vunpack.c.l.bf16 %v238
  %v250 = vunpack.c.h.bf16 %v238
  %v251 = vunpack.c.l.bf16 %v239
  %v252 = vmax.f32 %v208, %v240
  %v253 = vmax.f32 %v209, %v241
  %v254 = vmax.f32 %v210, %v242
  %v255 = vmax.f32 %v211, %v243
  %v256 = vmax.f32 %v212, %v244
  %v257 = vmax.f32 %v213, %v245
  %v258 = vmax.f32 %v214, %v246
  %v259 = vmax.f32 %v215, %v247
  %v260 = vmax.f32 %v216, %v248
  %v261 = vmax.f32 %v217, %v249
  %v262 = vmax.f32 %v218, %v250
  %v263 = vmax.f32 %v219, %v251
  %v264 = vpack.c.bf16 %v255, %v252
  %v265 = vpack.c.bf16 %v256, %v253
  %v266 = vpack.c.bf16 %v257, %v254
  %v267 = vpack.c.bf16 %v261, %v258
  %v268 = vpack.c.bf16 %v262, %v259
  %v269 = vpack.c.bf16 %v263, %v260
  %v270 = vld [vmem:[%s3] sm:$0xf]
  %v271 = vld [vmem:[%s3 + $0x4] sm:$0xf]
  %v272 = vld [vmem:[%s3 + $0x8] sm:$0xf]
  %v273 = vld [vmem:[%s3 + $0xc] sm:$0xf]
  %v278 = vunpack.c.l.b16 %v270
  %v279 = vunpack.c.l.b16 %v271
  %v280 = vunpack.c.l.b16 %v272
  %v281 = vunpack.c.l.b16 %v273
  %v282 = vpack.c.b16 %v279, %v278
  %v283 = vpack.c.b16 %v281, %v280
  %vm284 = vcmask 261120
  %v286 = vsel %vm284, %v282, 0
  %v289 = vsel %vm284, %v283, 0
  %291 = vmatpush.bf16.msra.mxu0 0
  %292 = vmatpush.bf16.msra.mxu0 0
  %293 = vmatpush.bf16.msra.mxu0 0
  %294 = vmatpush.bf16.msra.mxu0 0
  %295 = vmatpush.bf16.msra.mxu0 0
  %296 = vmatpush.bf16.msra.mxu0 0
  %297 = vmatpush.bf16.msra.mxu0 %v267
  %298 = vmatpush.bf16.msra.mxu0 %v264
  %299 = vmatmul.bf16.gmra.mxu0 %v286
  %v300 = vpop.f32.mrf.mxu0
  %v301 = vadd.f32 0.0, %v300
  %v302 = vpop.f32.mrf.mxu0
  %v303 = vadd.f32 0.0, %v302
  %304 = vmatmul.bf16.gmra.mxu0 %v289
  %v305 = vpop.f32.mrf.mxu0
  %v306 = vadd.f32 0.0, %v305
  %v307 = vpop.f32.mrf.mxu0
  %v308 = vadd.f32 0.0, %v307
  %309 = vdwg.mxu0
  %310 = vmatpush.bf16.msra.mxu0 0
  %311 = vmatpush.bf16.msra.mxu0 0
  %312 = vmatpush.bf16.msra.mxu0 0
  %313 = vmatpush.bf16.msra.mxu0 0
  %314 = vmatpush.bf16.msra.mxu0 0
  %315 = vmatpush.bf16.msra.mxu0 0
  %316 = vmatpush.bf16.msra.mxu0 %v268
  %317 = vmatpush.bf16.msra.mxu0 %v265
  %318 = vmatmul.bf16.gmra.mxu0 %v286
  %v319 = vpop.f32.mrf.mxu0
  %v320 = vadd.f32 0.0, %v319
  %v321 = vpop.f32.mrf.mxu0
  %v322 = vadd.f32 0.0, %v321
  %323 = vmatmul.bf16.gmra.mxu0 %v289
  %v324 = vpop.f32.mrf.mxu0
  %v325 = vadd.f32 0.0, %v324
  %v326 = vpop.f32.mrf.mxu0
  %v327 = vadd.f32 0.0, %v326
  %328 = vdwg.mxu0
  %329 = vmatpush.bf16.msra.mxu0 0
  %330 = vmatpush.bf16.msra.mxu0 0
  %331 = vmatpush.bf16.msra.mxu0 0
  %332 = vmatpush.bf16.msra.mxu0 0
  %333 = vmatpush.bf16.msra.mxu0 0
  %334 = vmatpush.bf16.msra.mxu0 0
  %335 = vmatpush.bf16.msra.mxu0 %v269
  %336 = vmatpush.bf16.msra.mxu0 %v266
  %337 = vmatmul.bf16.gmra.mxu0 %v286
  %v338 = vpop.f32.mrf.mxu0
  %v339 = vadd.f32 0.0, %v338
  %v340 = vpop.f32.mrf.mxu0
  %v341 = vadd.f32 0.0, %v340
  %342 = vmatmul.bf16.gmra.mxu0 %v289
  %v343 = vpop.f32.mrf.mxu0
  %v344 = vadd.f32 0.0, %v343
  %v345 = vpop.f32.mrf.mxu0
  %v346 = vadd.f32 0.0, %v345
  %347 = vdwg.mxu0
  %v348 = vpack.c.bf16 %v320, %v301
  %v349 = vpack.c.bf16 %v339, %v339
  %v350 = vpack.c.bf16 %v322, %v303
  %v351 = vpack.c.bf16 %v341, %v341
  %v352 = vpack.c.bf16 %v325, %v306
  %v353 = vpack.c.bf16 %v344, %v344
  %v354 = vpack.c.bf16 %v327, %v308
  %v355 = vpack.c.bf16 %v346, %v346
  %356 = vset.pattern.permute.xlu0 1
  %357 = vperm.xlu0 %356, %v132
  %v358 = vpop.permute.xlu0 %357
  %v361 = vunpack.c.l.s4 839922192
  %v362 = vunpack.c.0.s8 %v361
  %v363 = vperm.slane %v358, %v362
  %364 = vset.pattern.permute.xlu0 1
  %365 = vperm.xlu0 %364, %v133
  %v366 = vpop.permute.xlu0 %365
  %v369 = vunpack.c.l.s4 839922192
  %v370 = vunpack.c.0.s8 %v369
  %v371 = vperm.slane %v366, %v370
  %372 = vset.pattern.permute.xlu0 1
  %373 = vperm.xlu0 %372, %v134
  %v374 = vpop.permute.xlu0 %373
  %v377 = vunpack.c.l.s4 839922192
  %v378 = vunpack.c.0.s8 %v377
  %v379 = vperm.slane %v374, %v378
  %380 = vset.pattern.permute.xlu0 1
  %381 = vperm.xlu0 %380, %v135
  %v382 = vpop.permute.xlu0 %381
  %v385 = vunpack.c.l.s4 839922192
  %v386 = vunpack.c.0.s8 %v385
  %v387 = vperm.slane %v382, %v386
  %v388 = vunpack.c.l.bf16 %v348
  %v389 = vunpack.c.h.bf16 %v348
  %v390 = vunpack.c.l.bf16 %v349
  %v391 = vunpack.c.l.bf16 %v350
  %v392 = vunpack.c.h.bf16 %v350
  %v393 = vunpack.c.l.bf16 %v351
  %v394 = vunpack.c.l.bf16 %v352
  %v395 = vunpack.c.h.bf16 %v352
  %v396 = vunpack.c.l.bf16 %v353
  %v397 = vunpack.c.l.bf16 %v354
  %v398 = vunpack.c.h.bf16 %v354
  %v399 = vunpack.c.l.bf16 %v355
  %v400 = vunpack.c.l.bf16 %v363
  %v401 = vunpack.c.l.bf16 %v371
  %v402 = vunpack.c.l.bf16 %v379
  %v403 = vunpack.c.l.bf16 %v387
  %v404 = vadd.f32 %v388, %v400
  %v405 = vadd.f32 %v389, %v400
  %v406 = vadd.f32 %v390, %v400
  %v407 = vadd.f32 %v391, %v401
  %v408 = vadd.f32 %v392, %v401
  %v409 = vadd.f32 %v393, %v401
  %v410 = vadd.f32 %v394, %v402
  %v411 = vadd.f32 %v395, %v402
  %v412 = vadd.f32 %v396, %v402
  %v413 = vadd.f32 %v397, %v403
  %v414 = vadd.f32 %v398, %v403
  %v415 = vadd.f32 %v399, %v403
  %v416 = vpack.c.bf16 %v405, %v404
  %v417 = vpack.c.bf16 %v406, %v406
  %v418 = vpack.c.bf16 %v408, %v407
  %v419 = vpack.c.bf16 %v409, %v409
  %v420 = vpack.c.bf16 %v411, %v410
  %v421 = vpack.c.bf16 %v412, %v412
  %v422 = vpack.c.bf16 %v414, %v413
  %v423 = vpack.c.bf16 %v415, %v415
  %v424 = vunpack.c.l.bf16 %v416
  %v425 = vunpack.c.h.bf16 %v416
  %v426 = vunpack.c.l.bf16 %v417
  %v427 = vunpack.c.l.bf16 %v418
  %v428 = vunpack.c.h.bf16 %v418
  %v429 = vunpack.c.l.bf16 %v419
  %v430 = vunpack.c.l.bf16 %v420
  %v431 = vunpack.c.h.bf16 %v420
  %v432 = vunpack.c.l.bf16 %v421
  %v433 = vunpack.c.l.bf16 %v422
  %v434 = vunpack.c.h.bf16 %v422
  %v435 = vunpack.c.l.bf16 %v423
  %v436 = vmul.f32 %v424, 0.010009766
  %v437 = vmul.f32 %v425, 0.010009766
  %v438 = vmul.f32 %v426, 0.010009766
  %v439 = vmul.f32 %v427, 0.010009766
  %v440 = vmul.f32 %v428, 0.010009766
  %v441 = vmul.f32 %v429, 0.010009766
  %v442 = vmul.f32 %v430, 0.010009766
  %v443 = vmul.f32 %v431, 0.010009766
  %v444 = vmul.f32 %v432, 0.010009766
  %v445 = vmul.f32 %v433, 0.010009766
  %v446 = vmul.f32 %v434, 0.010009766
  %v447 = vmul.f32 %v435, 0.010009766
  %v448 = vpack.c.bf16 %v437, %v436
  %v449 = vpack.c.bf16 %v438, %v438
  %v450 = vpack.c.bf16 %v440, %v439
  %v451 = vpack.c.bf16 %v441, %v441
  %v452 = vpack.c.bf16 %v443, %v442
  %v453 = vpack.c.bf16 %v444, %v444
  %v454 = vpack.c.bf16 %v446, %v445
  %v455 = vpack.c.bf16 %v447, %v447
  %v456 = vunpack.c.l.bf16 %v448
  %v457 = vunpack.c.h.bf16 %v448
  %v458 = vunpack.c.l.bf16 %v449
  %v459 = vunpack.c.l.bf16 %v450
  %v460 = vunpack.c.h.bf16 %v450
  %v461 = vunpack.c.l.bf16 %v451
  %v462 = vunpack.c.l.bf16 %v452
  %v463 = vunpack.c.h.bf16 %v452
  %v464 = vunpack.c.l.bf16 %v453
  %v465 = vunpack.c.l.bf16 %v454
  %v466 = vunpack.c.h.bf16 %v454
  %v467 = vunpack.c.l.bf16 %v455
  %v468 = vmax.f32 %v424, %v456
  %v469 = vmax.f32 %v425, %v457
  %v470 = vmax.f32 %v426, %v458
  %v471 = vmax.f32 %v427, %v459
  %v472 = vmax.f32 %v428, %v460
  %v473 = vmax.f32 %v429, %v461
  %v474 = vmax.f32 %v430, %v462
  %v475 = vmax.f32 %v431, %v463
  %v476 = vmax.f32 %v432, %v464
  %v477 = vmax.f32 %v433, %v465
  %v478 = vmax.f32 %v434, %v466
  %v479 = vmax.f32 %v435, %v467
  %v480 = vpack.c.bf16 %v471, %v468
  %v481 = vpack.c.bf16 %v472, %v469
  %v482 = vpack.c.bf16 %v473, %v470
  %v483 = vpack.c.bf16 %v477, %v474
  %v484 = vpack.c.bf16 %v478, %v475
  %v485 = vpack.c.bf16 %v479, %v476
  %v486 = vld [vmem:[%s4] sm:$0x1]
  %488 = vset.pattern.permute.xlu0 2
  %489 = vperm.xlu0 %488, %v25
  %v490 = vpop.permute.xlu0 %489
  %v493 = vsel %vm284, %v486, 0
  %495 = vmatpush.bf16.msra.mxu0 0
  %496 = vmatpush.bf16.msra.mxu0 0
  %497 = vmatpush.bf16.msra.mxu0 0
  %498 = vmatpush.bf16.msra.mxu0 0
  %499 = vmatpush.bf16.msra.mxu0 0
  %500 = vmatpush.bf16.msra.mxu0 0
  %501 = vmatpush.bf16.msra.mxu0 %v483
  %502 = vmatpush.bf16.msra.mxu0 %v480
  %503 = vmatmul.bf16.gmra.mxu0 %v493
  %v504 = vpop.f32.mrf.mxu0
  %v505 = vadd.f32 %v490, %v504
  %v506 = vpop.f32.mrf.mxu0
  %507 = vdwg.mxu0
  %508 = vmatpush.bf16.msra.mxu0 0
  %509 = vmatpush.bf16.msra.mxu0 0
  %510 = vmatpush.bf16.msra.mxu0 0
  %511 = vmatpush.bf16.msra.mxu0 0
  %512 = vmatpush.bf16.msra.mxu0 0
  %513 = vmatpush.bf16.msra.mxu0 0
  %514 = vmatpush.bf16.msra.mxu0 %v484
  %515 = vmatpush.bf16.msra.mxu0 %v481
  %516 = vmatmul.bf16.gmra.mxu0 %v493
  %v517 = vpop.f32.mrf.mxu0
  %v518 = vadd.f32 %v490, %v517
  %v519 = vpop.f32.mrf.mxu0
  %520 = vdwg.mxu0
  %521 = vmatpush.bf16.msra.mxu0 0
  %522 = vmatpush.bf16.msra.mxu0 0
  %523 = vmatpush.bf16.msra.mxu0 0
  %524 = vmatpush.bf16.msra.mxu0 0
  %525 = vmatpush.bf16.msra.mxu0 0
  %526 = vmatpush.bf16.msra.mxu0 0
  %527 = vmatpush.bf16.msra.mxu0 %v485
  %528 = vmatpush.bf16.msra.mxu0 %v482
  %529 = vmatmul.bf16.gmra.mxu0 %v493
  %v530 = vpop.f32.mrf.mxu0
  %v531 = vadd.f32 %v490, %v530
  %v532 = vpop.f32.mrf.mxu0
  %533 = vdwg.mxu0
  %v537 = vrot.slane %v518, 7
  %v538 = vrot.slane %v531, 6
  %vm539 = vcmask 1040384
  %v540 = vsel %vm539, %v505, %v537
  %vm541 = vcmask 1041408
  %v542 = vsel %vm541, %v540, %v538
  %v544 = vlaneseq
  %vm545 = vcmp.ge.s32.totalorder %v544, 0
  %vm546 = vcmp.lt.s32.totalorder %v544, 384
  %vm547 = vmand %vm545, %vm546
  %548 = vst.msk [vmem:[%s5] sm:$0x7] %vm547, %v542
  // Predicated region
  $region22: #{mlp_sdf_predictor.1} parent=0 // pred_check
    _
  $region23: #{mlp_sdf_predictor.1} parent=0 // pred_check_branch
    %550 = sbr.rel (0) target = $region25
  $region24: #{mlp_sdf_predictor.1} parent=0 // pred_region
    _
  $region25: #{mlp_sdf_predictor.1} parent=0 // pred_fallthru
    _
  // Predicated region
  $region26: #{mlp_sdf_predictor.1} parent=0 // pred_check
    _
  $region27: #{mlp_sdf_predictor.1} parent=0 // pred_check_branch
    %552 = sbr.rel (0) target = $region29
  $region28: #{mlp_sdf_predictor.1} parent=0 // pred_region
    _
  $region29: #{mlp_sdf_predictor.1} parent=0 // pred_fallthru
    _

</llo_original>
